<compile_context>
chip_gen: v6e
topology: v6e:2x2x1
jax: 0.10.0
libtpu: 0.0.40
codegen_flags: <defaults>
</compile_context>

<pallas_src>
import jax
import jax.numpy as jnp
from jax import lax
from jax.experimental import pallas as pl
from jax.experimental.pallas import tpu as pltpu


# ----------------------------- kernel ----------------------------------------

def _make_block_kernel(H, W, planes):
    S = H * W
    PAD = W + 1                       # interior start inside the flat padded buffer

    def kernel(x_ref, w1_ref, b1_ref, w2_ref, b2_ref, o_ref, pad_ref, col_ref):
        # x_ref   : (planes, S)        input image, channel-major, flattened HW
        # w*_ref  : (planes, 9*planes) scale-folded conv weights, im2col layout
        # b*_ref  : (planes, 1)        folded BN+FiLM bias
        # o_ref   : (planes, S)        output block
        # pad_ref : (planes, S+2W+2)   flat zero-padded activation (VMEM scratch)
        # col_ref : (9*planes, S)      im2col patch matrix        (VMEM scratch)

        # Column-within-row of every output pixel, for left/right edge masking.
        col = lax.broadcasted_iota(jnp.int32, (1, S), 1) % W
        not_left = jnp.broadcast_to(col != 0, (planes, S))        # hoisted once
        not_right = jnp.broadcast_to(col != (W - 1), (planes, S))

        def conv3x3(w_mat, bias):
            """3x3 'same' conv of the image currently sitting in pad_ref."""
            for dy in range(3):
                for dx in range(3):
                    off = dy * W + dx
                    patch = pad_ref[:, off:off + S]          # (planes, S) slice
                    if dx == 0:        # reads column x-1 -> invalid at x == 0
                        patch = jnp.where(not_left, patch, 0.0)
                    elif dx == 2:      # reads column x+1 -> invalid at x == W-1
                        patch = jnp.where(not_right, patch, 0.0)
                    t = dy * 3 + dx
                    col_ref[t * planes:(t + 1) * planes, :] = patch
            # Single MXU matmul, K = 9*Cin (BN/FiLM scale already in w_mat).
            acc = jnp.dot(w_mat, col_ref[...],
                          preferred_element_type=jnp.float32)
            return acc + bias

        # Zero the padded buffer once; its borders stay zero for both convs.
        pad_ref[...] = jnp.zeros_like(pad_ref)

        # Load x once: conv1 input AND residual term (single HBM DMA of x).
        x = x_ref[...].astype(jnp.float32)
        pad_ref[:, PAD:PAD + S] = x

        # conv1 -> folded(bn1, film1) -> relu        (intermediate stays in VMEM)
        h = jnp.maximum(conv3x3(w1_ref[...], b1_ref[...]), 0.0)
        pad_ref[:, PAD:PAD + S] = h

        # conv2 -> folded(bn2, film2) -> +identity -> relu
        y = conv3x3(w2_ref[...], b2_ref[...]) + x
        o_ref[...] = jnp.maximum(y, 0.0).astype(o_ref.dtype)   # lane-dense store

    return kernel


# ----------------------------- wrapper ----------------------------------------

@jax.jit
def film_basic_block_forward(x_nchw, w1_oihw, scale1, bias1,
                             w2_oihw, scale2, bias2):
    """FiLM BasicBlock forward.  x: (N, C, H, W) float32 -> (N, C, H, W)."""
    N, C, H, W = x_nchw.shape
    planes = w1_oihw.shape[0]
    assert planes == C and w1_oihw.shape[1] == C, \
        "stride=1 / no-downsample block requires inplanes == planes"
    S = H * W
    B = S + 2 * W + 2                 # flat padded buffer length

    def fold(w_oihw, scale):
        # Fold the per-channel scale into the weights and flatten
        # OIHW -> (Cout, ky*kx*Cin), matching the kernel's im2col row order.
        w = w_oihw * scale[:, None, None, None]
        return jnp.transpose(w, (0, 2, 3, 1)).reshape(planes, 9 * C)

    w1m = fold(w1_oihw, scale1).astype(jnp.float32)
    w2m = fold(w2_oihw, scale2).astype(jnp.float32)
    b1 = bias1.reshape(planes, 1).astype(jnp.float32)
    b2 = bias2.reshape(planes, 1).astype(jnp.float32)
    x_flat = x_nchw.reshape(N, C, S)   # metadata-only reshape of contiguous NCHW

    out = pl.pallas_call(
        _make_block_kernel(H, W, planes),
        out_shape=jax.ShapeDtypeStruct((N, planes, S), x_nchw.dtype),
        grid=(N,),
        in_specs=[
            pl.BlockSpec((None, C, S), lambda n: (n, 0, 0)),        # x (per image)
            pl.BlockSpec((planes, 9 * C), lambda n: (0, 0)),        # w1 (resident)
            pl.BlockSpec((planes, 1), lambda n: (0, 0)),            # b1
            pl.BlockSpec((planes, 9 * C), lambda n: (0, 0)),        # w2
            pl.BlockSpec((planes, 1), lambda n: (0, 0)),            # b2
        ],
        out_specs=pl.BlockSpec((None, planes, S), lambda n: (n, 0, 0)),
        scratch_shapes=[
            pltpu.VMEM((planes, B), jnp.float32),      # flat zero-padded activation
            pltpu.VMEM((9 * planes, S), jnp.float32),  # im2col patches
        ],
        compiler_params=pltpu.CompilerParams(
            dimension_semantics=("parallel",)),        # 2x on v7x's dual TC
    )(x_flat, w1m, b1, w2m, b2)

    return out.reshape(N, planes, H, W)


# ----------------------------- reference (plain JAX) --------------------------

def _reference_forward(x_nchw, w1_oihw, scale1, bias1, w2_oihw, scale2, bias2):
    dn = lax.conv_dimension_numbers(x_nchw.shape, w1_oihw.shape,
                                    ('NCHW', 'OIHW', 'NCHW'))
    y = lax.conv_general_dilated(x_nchw, w1_oihw, (1, 1), 'SAME',
                                 dimension_numbers=dn)
    y = jnp.maximum(y * scale1[None, :, None, None]
                    + bias1[None, :, None, None], 0.0)
    z = lax.conv_general_dilated(y, w2_oihw, (1, 1), 'SAME',
                                 dimension_numbers=dn)
    z = z * scale2[None, :, None, None] + bias2[None, :, None, None]
    return jnp.maximum(z + x_nchw, 0.0)


# ----------------------------- main -------------------------------------------

if __name__ == "__main__":
    N, C, H, W = 2, 4, 16, 16          # inplanes = planes = 4, stride = 1
    planes = C
    eps = 1e-5

    key = jax.random.PRNGKey(0)
    k = jax.random.split(key, 14)

    x = jax.random.normal(k[0], (N, C, H, W), jnp.float32)

    # Conv weights (PyTorch OIHW layout), deterministic init.
    w1 = 0.1 * jax.random.normal(k[1], (planes, C, 3, 3), jnp.float32)
    w2 = 0.1 * jax.random.normal(k[2], (planes, planes, 3, 3), jnp.float32)

    # Inference BatchNorm stats + FiLM (gamma, beta) adaptation per conv.
    bn_g1 = 1.0 + 0.1 * jax.random.normal(k[3], (planes,), jnp.float32)
    bn_b1 = 0.1 * jax.random.normal(k[4], (planes,), jnp.float32)
    mean1 = 0.1 * jax.random.normal(k[5], (planes,), jnp.float32)
    var1 = jnp.abs(1.0 + 0.1 * jax.random.normal(k[6], (planes,), jnp.float32))
    film_g1 = 1.0 + 0.1 * jax.random.normal(k[7], (planes,), jnp.float32)
    film_b1 = 0.1 * jax.random.normal(k[8], (planes,), jnp.float32)

    bn_g2 = 1.0 + 0.1 * jax.random.normal(k[9], (planes,), jnp.float32)
    bn_b2 = 0.1 * jax.random.normal(k[10], (planes,), jnp.float32)
    mean2 = 0.1 * jax.random.normal(k[11], (planes,), jnp.float32)
    var2 = jnp.abs(1.0 + 0.05 * jax.random.normal(k[12], (planes,), jnp.float32))
    film_g2 = 1.0 + 0.1 * jax.random.normal(k[13], (planes,), jnp.float32)
    film_b2 = 0.1 * bn_b1

    # Fold inference BN and FiLM into one per-channel scale / bias:
    #   film(bn(z)) = film_g * (bn_scale * z + bn_bias) + film_b
    def fold_bn_film(bn_g, bn_b, mean, var, f_g, f_b):
        bn_scale = bn_g / jnp.sqrt(var + eps)
        bn_bias = bn_b - mean * bn_scale
        return f_g * bn_scale, f_g * bn_bias + f_b

    scale1, bias1 = fold_bn_film(bn_g1, bn_b1, mean1, var1, film_g1, film_b1)
    scale2, bias2 = fold_bn_film(bn_g2, bn_b2, mean2, var2, film_g2, film_b2)

    out = film_basic_block_forward(x, w1, scale1, bias1, w2, scale2, bias2)
    out = jax.block_until_ready(out)

    ref = _reference_forward(x, w1, scale1, bias1, w2, scale2, bias2)
    assert out.shape == (N, C, H, W)
    err = jnp.max(jnp.abs(out - ref))
    assert jnp.allclose(out, ref, atol=1e-3, rtol=1e-3), \
        f"mismatch vs reference: max|delta|={err}"

    print("KERNEL_OK")
</pallas_src>

<mosaic_0001>
module attributes {stable_mosaic.version = 11 : i64} {
  func.func @kernel(%arg0: i32, %arg1: memref<1x4x256xf32, #tpu.memory_space<vmem>>, %arg2: memref<4x36xf32, #tpu.memory_space<vmem>>, %arg3: memref<4x1xf32, #tpu.memory_space<vmem>>, %arg4: memref<4x36xf32, #tpu.memory_space<vmem>>, %arg5: memref<4x1xf32, #tpu.memory_space<vmem>>, %arg6: memref<1x4x256xf32, #tpu.memory_space<vmem>>, %arg7: memref<4x290xf32, #tpu.memory_space<vmem>>, %arg8: memref<36x256xf32, #tpu.memory_space<vmem>>) attributes {dimension_semantics = [#tpu.dimension_semantics<parallel>], iteration_bounds = array<i64: 2>, scalar_prefetch = 0 : i64, scratch_operands = 2 : i64, tpu.core_type = #tpu.core_type<tc>, window_params = [{transform_indices = @transform_0, window_bounds = array<i64: 1, 4, 256>}, {pipeline_mode = #tpu.pipeline_mode<synchronous>, transform_indices = @transform_1, window_bounds = array<i64: 4, 36>}, {pipeline_mode = #tpu.pipeline_mode<synchronous>, transform_indices = @transform_2, window_bounds = array<i64: 4, 1>}, {pipeline_mode = #tpu.pipeline_mode<synchronous>, transform_indices = @transform_3, window_bounds = array<i64: 4, 36>}, {pipeline_mode = #tpu.pipeline_mode<synchronous>, transform_indices = @transform_4, window_bounds = array<i64: 4, 1>}, {transform_indices = @transform_5, window_bounds = array<i64: 1, 4, 256>}]} {
    %0 = tpu.iota {dimensions = array<i32: 1>} : vector<1x256xi32>
    %c16_i32 = arith.constant 16 : i32
    %c0_i32 = arith.constant 0 : i32
    %1 = arith.cmpi eq, %c16_i32, %c0_i32 : i32
    %c1_i32 = arith.constant 1 : i32
    %2 = arith.select %1, %c1_i32, %c16_i32 : i32
    %3 = vector.broadcast %2 : i32 to vector<1x256xi32>
    %4 = arith.remsi %0, %3 : vector<1x256xi32>
    %c0_i32_0 = arith.constant 0 : i32
    %5 = vector.broadcast %c0_i32_0 : i32 to vector<1x256xi32>
    %6 = arith.cmpi ne, %4, %5 : vector<1x256xi32>
    %c0_i32_1 = arith.constant 0 : i32
    %7 = vector.broadcast %c0_i32_1 : i32 to vector<1x256xi32>
    %8 = arith.cmpi slt, %4, %7 : vector<1x256xi32>
    %c0_i32_2 = arith.constant 0 : i32
    %9 = arith.cmpi slt, %2, %c0_i32_2 : i32
    %10 = vector.broadcast %9 : i1 to vector<1x256xi1>
    %11 = vector.broadcast %10 : vector<1x256xi1> to vector<1x256xi1>
    %12 = arith.xori %8, %11 : vector<1x256xi1>
    %13 = arith.andi %12, %6 : vector<1x256xi1>
    %14 = vector.broadcast %2 : i32 to vector<1x256xi32>
    %15 = arith.addi %4, %14 : vector<1x256xi32>
    %16 = arith.select %13, %15, %4 : vector<1x256xi1>, vector<1x256xi32>
    %c0_i32_3 = arith.constant 0 : i32
    %17 = vector.broadcast %c0_i32_3 : i32 to vector<1x256xi32>
    %18 = arith.cmpi ne, %16, %17 : vector<1x256xi32>
    %19 = vector.shape_cast %18 : vector<1x256xi1> to vector<1x256xi1>
    %20 = vector.broadcast %19 : vector<1x256xi1> to vector<4x256xi1>
    %c15_i32 = arith.constant 15 : i32
    %21 = vector.broadcast %c15_i32 : i32 to vector<1x256xi32>
    %22 = arith.cmpi ne, %16, %21 : vector<1x256xi32>
    %23 = vector.shape_cast %22 : vector<1x256xi1> to vector<1x256xi1>
    %24 = vector.broadcast %23 : vector<1x256xi1> to vector<4x256xi1>
    %cst = arith.constant 0.000000e+00 : f32
    %25 = vector.broadcast %cst : f32 to vector<4x290xf32>
    %c0 = arith.constant 0 : index
    %c0_4 = arith.constant 0 : index
    %26 = vector.load %arg7[%c0, %c0_4] : memref<4x290xf32, #tpu.memory_space<vmem>>, vector<4x290xf32>
    tpu.vector_store %arg7[%c0, %c0_4], %25 {strides = array<i32>} : memref<4x290xf32, #tpu.memory_space<vmem>>, vector<4x290xf32>,
    %c0_5 = arith.constant 0 : index
    %c0_6 = arith.constant 0 : index
    %c0_7 = arith.constant 0 : index
    %27 = vector.load %arg1[%c0_5, %c0_6, %c0_7] : memref<1x4x256xf32, #tpu.memory_space<vmem>>, vector<1x4x256xf32>
    %28 = vector.shape_cast %27 : vector<1x4x256xf32> to vector<4x256xf32>
    %c0_8 = arith.constant 0 : index
    %c17 = arith.constant 17 : index
    %29 = vector.load %arg7[%c0_8, %c17] : memref<4x290xf32, #tpu.memory_space<vmem>>, vector<4x256xf32>
    tpu.vector_store %arg7[%c0_8, %c17], %28 {strides = array<i32>} : memref<4x290xf32, #tpu.memory_space<vmem>>, vector<4x256xf32>,
    %c0_9 = arith.constant 0 : index
    %c0_10 = arith.constant 0 : index
    %30 = vector.load %arg2[%c0_9, %c0_10] : memref<4x36xf32, #tpu.memory_space<vmem>>, vector<4x36xf32>
    %c0_11 = arith.constant 0 : index
    %c0_12 = arith.constant 0 : index
    %31 = vector.load %arg3[%c0_11, %c0_12] : memref<4x1xf32, #tpu.memory_space<vmem>>, vector<4x1xf32>
    %c0_13 = arith.constant 0 : index
    %c0_14 = arith.constant 0 : index
    %32 = vector.load %arg7[%c0_13, %c0_14] : memref<4x290xf32, #tpu.memory_space<vmem>>, vector<4x256xf32>
    %cst_15 = arith.constant 0.000000e+00 : f32
    %33 = vector.broadcast %cst_15 : f32 to vector<4x256xf32>
    %34 = arith.select %20, %32, %33 : vector<4x256xi1>, vector<4x256xf32>
    %c0_16 = arith.constant 0 : index
    %c0_17 = arith.constant 0 : index
    %35 = vector.load %arg8[%c0_16, %c0_17] : memref<36x256xf32, #tpu.memory_space<vmem>>, vector<4x256xf32>
    tpu.vector_store %arg8[%c0_16, %c0_17], %34 {strides = array<i32>} : memref<36x256xf32, #tpu.memory_space<vmem>>, vector<4x256xf32>,
    %c0_18 = arith.constant 0 : index
    %c1 = arith.constant 1 : index
    %36 = vector.load %arg7[%c0_18, %c1] : memref<4x290xf32, #tpu.memory_space<vmem>>, vector<4x256xf32>
    %c4 = arith.constant 4 : index
    %c0_19 = arith.constant 0 : index
    %37 = vector.load %arg8[%c4, %c0_19] : memref<36x256xf32, #tpu.memory_space<vmem>>, vector<4x256xf32>
    tpu.vector_store %arg8[%c4, %c0_19], %36 {strides = array<i32>} : memref<36x256xf32, #tpu.memory_space<vmem>>, vector<4x256xf32>,
    %c0_20 = arith.constant 0 : index
    %c2 = arith.constant 2 : index
    %38 = vector.load %arg7[%c0_20, %c2] : memref<4x290xf32, #tpu.memory_space<vmem>>, vector<4x256xf32>
    %cst_21 = arith.constant 0.000000e+00 : f32
    %39 = vector.broadcast %cst_21 : f32 to vector<4x256xf32>
    %40 = arith.select %24, %38, %39 : vector<4x256xi1>, vector<4x256xf32>
    %c8 = arith.constant 8 : index
    %c0_22 = arith.constant 0 : index
    %41 = vector.load %arg8[%c8, %c0_22] : memref<36x256xf32, #tpu.memory_space<vmem>>, vector<4x256xf32>
    tpu.vector_store %arg8[%c8, %c0_22], %40 {strides = array<i32>} : memref<36x256xf32, #tpu.memory_space<vmem>>, vector<4x256xf32>,
    %c0_23 = arith.constant 0 : index
    %c16 = arith.constant 16 : index
    %42 = vector.load %arg7[%c0_23, %c16] : memref<4x290xf32, #tpu.memory_space<vmem>>, vector<4x256xf32>
    %cst_24 = arith.constant 0.000000e+00 : f32
    %43 = vector.broadcast %cst_24 : f32 to vector<4x256xf32>
    %44 = arith.select %20, %42, %43 : vector<4x256xi1>, vector<4x256xf32>
    %c12 = arith.constant 12 : index
    %c0_25 = arith.constant 0 : index
    %45 = vector.load %arg8[%c12, %c0_25] : memref<36x256xf32, #tpu.memory_space<vmem>>, vector<4x256xf32>
    tpu.vector_store %arg8[%c12, %c0_25], %44 {strides = array<i32>} : memref<36x256xf32, #tpu.memory_space<vmem>>, vector<4x256xf32>,
    %c0_26 = arith.constant 0 : index
    %c17_27 = arith.constant 17 : index
    %46 = vector.load %arg7[%c0_26, %c17_27] : memref<4x290xf32, #tpu.memory_space<vmem>>, vector<4x256xf32>
    %c16_28 = arith.constant 16 : index
    %c0_29 = arith.constant 0 : index
    %47 = vector.load %arg8[%c16_28, %c0_29] : memref<36x256xf32, #tpu.memory_space<vmem>>, vector<4x256xf32>
    tpu.vector_store %arg8[%c16_28, %c0_29], %46 {strides = array<i32>} : memref<36x256xf32, #tpu.memory_space<vmem>>, vector<4x256xf32>,
    %c0_30 = arith.constant 0 : index
    %c18 = arith.constant 18 : index
    %48 = vector.load %arg7[%c0_30, %c18] : memref<4x290xf32, #tpu.memory_space<vmem>>, vector<4x256xf32>
    %cst_31 = arith.constant 0.000000e+00 : f32
    %49 = vector.broadcast %cst_31 : f32 to vector<4x256xf32>
    %50 = arith.select %24, %48, %49 : vector<4x256xi1>, vector<4x256xf32>
    %c20 = arith.constant 20 : index
    %c0_32 = arith.constant 0 : index
    %51 = vector.load %arg8[%c20, %c0_32] : memref<36x256xf32, #tpu.memory_space<vmem>>, vector<4x256xf32>
    tpu.vector_store %arg8[%c20, %c0_32], %50 {strides = array<i32>} : memref<36x256xf32, #tpu.memory_space<vmem>>, vector<4x256xf32>,
    %c0_33 = arith.constant 0 : index
    %c32 = arith.constant 32 : index
    %52 = vector.load %arg7[%c0_33, %c32] : memref<4x290xf32, #tpu.memory_space<vmem>>, vector<4x256xf32>
    %cst_34 = arith.constant 0.000000e+00 : f32
    %53 = vector.broadcast %cst_34 : f32 to vector<4x256xf32>
    %54 = arith.select %20, %52, %53 : vector<4x256xi1>, vector<4x256xf32>
    %c24 = arith.constant 24 : index
    %c0_35 = arith.constant 0 : index
    %55 = vector.load %arg8[%c24, %c0_35] : memref<36x256xf32, #tpu.memory_space<vmem>>, vector<4x256xf32>
    tpu.vector_store %arg8[%c24, %c0_35], %54 {strides = array<i32>} : memref<36x256xf32, #tpu.memory_space<vmem>>, vector<4x256xf32>,
    %c0_36 = arith.constant 0 : index
    %c33 = arith.constant 33 : index
    %56 = vector.load %arg7[%c0_36, %c33] : memref<4x290xf32, #tpu.memory_space<vmem>>, vector<4x256xf32>
    %c28 = arith.constant 28 : index
    %c0_37 = arith.constant 0 : index
    %57 = vector.load %arg8[%c28, %c0_37] : memref<36x256xf32, #tpu.memory_space<vmem>>, vector<4x256xf32>
    tpu.vector_store %arg8[%c28, %c0_37], %56 {strides = array<i32>} : memref<36x256xf32, #tpu.memory_space<vmem>>, vector<4x256xf32>,
    %c0_38 = arith.constant 0 : index
    %c34 = arith.constant 34 : index
    %58 = vector.load %arg7[%c0_38, %c34] : memref<4x290xf32, #tpu.memory_space<vmem>>, vector<4x256xf32>
    %cst_39 = arith.constant 0.000000e+00 : f32
    %59 = vector.broadcast %cst_39 : f32 to vector<4x256xf32>
    %60 = arith.select %24, %58, %59 : vector<4x256xi1>, vector<4x256xf32>
    %c32_40 = arith.constant 32 : index
    %c0_41 = arith.constant 0 : index
    %61 = vector.load %arg8[%c32_40, %c0_41] : memref<36x256xf32, #tpu.memory_space<vmem>>, vector<4x256xf32>
    tpu.vector_store %arg8[%c32_40, %c0_41], %60 {strides = array<i32>} : memref<36x256xf32, #tpu.memory_space<vmem>>, vector<4x256xf32>,
    %c0_42 = arith.constant 0 : index
    %c0_43 = arith.constant 0 : index
    %62 = vector.load %arg8[%c0_42, %c0_43] : memref<36x256xf32, #tpu.memory_space<vmem>>, vector<36x256xf32>
    %cst_44 = arith.constant dense<0.000000e+00> : vector<4x256xf32>
    %63 = tpu.matmul %30, %62, %cst_44 {dimension_numbers = #tpu.dot_dimension_numbers<[1], [0], [0], [1], [0, 0, 1, 1], [], []>} : vector<4x36xf32>, vector<36x256xf32>, vector<4x256xf32> -> vector<4x256xf32>
    %64 = vector.broadcast %31 : vector<4x1xf32> to vector<4x256xf32>
    %65 = arith.addf %63, %64 : vector<4x256xf32>
    %cst_45 = arith.constant 0.000000e+00 : f32
    %66 = vector.broadcast %cst_45 : f32 to vector<4x256xf32>
    %67 = arith.maximumf %65, %66 : vector<4x256xf32>
    %c0_46 = arith.constant 0 : index
    %c17_47 = arith.constant 17 : index
    %68 = vector.load %arg7[%c0_46, %c17_47] : memref<4x290xf32, #tpu.memory_space<vmem>>, vector<4x256xf32>
    tpu.vector_store %arg7[%c0_46, %c17_47], %67 {strides = array<i32>} : memref<4x290xf32, #tpu.memory_space<vmem>>, vector<4x256xf32>,
    %c0_48 = arith.constant 0 : index
    %c0_49 = arith.constant 0 : index
    %69 = vector.load %arg4[%c0_48, %c0_49] : memref<4x36xf32, #tpu.memory_space<vmem>>, vector<4x36xf32>
    %c0_50 = arith.constant 0 : index
    %c0_51 = arith.constant 0 : index
    %70 = vector.load %arg5[%c0_50, %c0_51] : memref<4x1xf32, #tpu.memory_space<vmem>>, vector<4x1xf32>
    %c0_52 = arith.constant 0 : index
    %c0_53 = arith.constant 0 : index
    %71 = vector.load %arg7[%c0_52, %c0_53] : memref<4x290xf32, #tpu.memory_space<vmem>>, vector<4x256xf32>
    %cst_54 = arith.constant 0.000000e+00 : f32
    %72 = vector.broadcast %cst_54 : f32 to vector<4x256xf32>
    %73 = arith.select %20, %71, %72 : vector<4x256xi1>, vector<4x256xf32>
    %c0_55 = arith.constant 0 : index
    %c0_56 = arith.constant 0 : index
    %74 = vector.load %arg8[%c0_55, %c0_56] : memref<36x256xf32, #tpu.memory_space<vmem>>, vector<4x256xf32>
    tpu.vector_store %arg8[%c0_55, %c0_56], %73 {strides = array<i32>} : memref<36x256xf32, #tpu.memory_space<vmem>>, vector<4x256xf32>,
    %c0_57 = arith.constant 0 : index
    %c1_58 = arith.constant 1 : index
    %75 = vector.load %arg7[%c0_57, %c1_58] : memref<4x290xf32, #tpu.memory_space<vmem>>, vector<4x256xf32>
    %c4_59 = arith.constant 4 : index
    %c0_60 = arith.constant 0 : index
    %76 = vector.load %arg8[%c4_59, %c0_60] : memref<36x256xf32, #tpu.memory_space<vmem>>, vector<4x256xf32>
    tpu.vector_store %arg8[%c4_59, %c0_60], %75 {strides = array<i32>} : memref<36x256xf32, #tpu.memory_space<vmem>>, vector<4x256xf32>,
    %c0_61 = arith.constant 0 : index
    %c2_62 = arith.constant 2 : index
    %77 = vector.load %arg7[%c0_61, %c2_62] : memref<4x290xf32, #tpu.memory_space<vmem>>, vector<4x256xf32>
    %cst_63 = arith.constant 0.000000e+00 : f32
    %78 = vector.broadcast %cst_63 : f32 to vector<4x256xf32>
    %79 = arith.select %24, %77, %78 : vector<4x256xi1>, vector<4x256xf32>
    %c8_64 = arith.constant 8 : index
    %c0_65 = arith.constant 0 : index
    %80 = vector.load %arg8[%c8_64, %c0_65] : memref<36x256xf32, #tpu.memory_space<vmem>>, vector<4x256xf32>
    tpu.vector_store %arg8[%c8_64, %c0_65], %79 {strides = array<i32>} : memref<36x256xf32, #tpu.memory_space<vmem>>, vector<4x256xf32>,
    %c0_66 = arith.constant 0 : index
    %c16_67 = arith.constant 16 : index
    %81 = vector.load %arg7[%c0_66, %c16_67] : memref<4x290xf32, #tpu.memory_space<vmem>>, vector<4x256xf32>
    %cst_68 = arith.constant 0.000000e+00 : f32
    %82 = vector.broadcast %cst_68 : f32 to vector<4x256xf32>
    %83 = arith.select %20, %81, %82 : vector<4x256xi1>, vector<4x256xf32>
    %c12_69 = arith.constant 12 : index
    %c0_70 = arith.constant 0 : index
    %84 = vector.load %arg8[%c12_69, %c0_70] : memref<36x256xf32, #tpu.memory_space<vmem>>, vector<4x256xf32>
    tpu.vector_store %arg8[%c12_69, %c0_70], %83 {strides = array<i32>} : memref<36x256xf32, #tpu.memory_space<vmem>>, vector<4x256xf32>,
    %c0_71 = arith.constant 0 : index
    %c17_72 = arith.constant 17 : index
    %85 = vector.load %arg7[%c0_71, %c17_72] : memref<4x290xf32, #tpu.memory_space<vmem>>, vector<4x256xf32>
    %c16_73 = arith.constant 16 : index
    %c0_74 = arith.constant 0 : index
    %86 = vector.load %arg8[%c16_73, %c0_74] : memref<36x256xf32, #tpu.memory_space<vmem>>, vector<4x256xf32>
    tpu.vector_store %arg8[%c16_73, %c0_74], %85 {strides = array<i32>} : memref<36x256xf32, #tpu.memory_space<vmem>>, vector<4x256xf32>,
    %c0_75 = arith.constant 0 : index
    %c18_76 = arith.constant 18 : index
    %87 = vector.load %arg7[%c0_75, %c18_76] : memref<4x290xf32, #tpu.memory_space<vmem>>, vector<4x256xf32>
    %cst_77 = arith.constant 0.000000e+00 : f32
    %88 = vector.broadcast %cst_77 : f32 to vector<4x256xf32>
    %89 = arith.select %24, %87, %88 : vector<4x256xi1>, vector<4x256xf32>
    %c20_78 = arith.constant 20 : index
    %c0_79 = arith.constant 0 : index
    %90 = vector.load %arg8[%c20_78, %c0_79] : memref<36x256xf32, #tpu.memory_space<vmem>>, vector<4x256xf32>
    tpu.vector_store %arg8[%c20_78, %c0_79], %89 {strides = array<i32>} : memref<36x256xf32, #tpu.memory_space<vmem>>, vector<4x256xf32>,
    %c0_80 = arith.constant 0 : index
    %c32_81 = arith.constant 32 : index
    %91 = vector.load %arg7[%c0_80, %c32_81] : memref<4x290xf32, #tpu.memory_space<vmem>>, vector<4x256xf32>
    %cst_82 = arith.constant 0.000000e+00 : f32
    %92 = vector.broadcast %cst_82 : f32 to vector<4x256xf32>
    %93 = arith.select %20, %91, %92 : vector<4x256xi1>, vector<4x256xf32>
    %c24_83 = arith.constant 24 : index
    %c0_84 = arith.constant 0 : index
    %94 = vector.load %arg8[%c24_83, %c0_84] : memref<36x256xf32, #tpu.memory_space<vmem>>, vector<4x256xf32>
    tpu.vector_store %arg8[%c24_83, %c0_84], %93 {strides = array<i32>} : memref<36x256xf32, #tpu.memory_space<vmem>>, vector<4x256xf32>,
    %c0_85 = arith.constant 0 : index
    %c33_86 = arith.constant 33 : index
    %95 = vector.load %arg7[%c0_85, %c33_86] : memref<4x290xf32, #tpu.memory_space<vmem>>, vector<4x256xf32>
    %c28_87 = arith.constant 28 : index
    %c0_88 = arith.constant 0 : index
    %96 = vector.load %arg8[%c28_87, %c0_88] : memref<36x256xf32, #tpu.memory_space<vmem>>, vector<4x256xf32>
    tpu.vector_store %arg8[%c28_87, %c0_88], %95 {strides = array<i32>} : memref<36x256xf32, #tpu.memory_space<vmem>>, vector<4x256xf32>,
    %c0_89 = arith.constant 0 : index
    %c34_90 = arith.constant 34 : index
    %97 = vector.load %arg7[%c0_89, %c34_90] : memref<4x290xf32, #tpu.memory_space<vmem>>, vector<4x256xf32>
    %cst_91 = arith.constant 0.000000e+00 : f32
    %98 = vector.broadcast %cst_91 : f32 to vector<4x256xf32>
    %99 = arith.select %24, %97, %98 : vector<4x256xi1>, vector<4x256xf32>
    %c32_92 = arith.constant 32 : index
    %c0_93 = arith.constant 0 : index
    %100 = vector.load %arg8[%c32_92, %c0_93] : memref<36x256xf32, #tpu.memory_space<vmem>>, vector<4x256xf32>
    tpu.vector_store %arg8[%c32_92, %c0_93], %99 {strides = array<i32>} : memref<36x256xf32, #tpu.memory_space<vmem>>, vector<4x256xf32>,
    %c0_94 = arith.constant 0 : index
    %c0_95 = arith.constant 0 : index
    %101 = vector.load %arg8[%c0_94, %c0_95] : memref<36x256xf32, #tpu.memory_space<vmem>>, vector<36x256xf32>
    %cst_96 = arith.constant dense<0.000000e+00> : vector<4x256xf32>
    %102 = tpu.matmul %69, %101, %cst_96 {dimension_numbers = #tpu.dot_dimension_numbers<[1], [0], [0], [1], [0, 0, 1, 1], [], []>} : vector<4x36xf32>, vector<36x256xf32>, vector<4x256xf32> -> vector<4x256xf32>
    %103 = vector.broadcast %70 : vector<4x1xf32> to vector<4x256xf32>
    %104 = arith.addf %102, %103 : vector<4x256xf32>
    %105 = arith.addf %104, %28 : vector<4x256xf32>
    %cst_97 = arith.constant 0.000000e+00 : f32
    %106 = vector.broadcast %cst_97 : f32 to vector<4x256xf32>
    %107 = arith.maximumf %105, %106 : vector<4x256xf32>
    %c0_98 = arith.constant 0 : index
    %c0_99 = arith.constant 0 : index
    %c0_100 = arith.constant 0 : index
    %108 = vector.load %arg6[%c0_98, %c0_99, %c0_100] : memref<1x4x256xf32, #tpu.memory_space<vmem>>, vector<1x4x256xf32>
    %109 = vector.shape_cast %108 : vector<1x4x256xf32> to vector<4x256xf32>
    %110 = vector.shape_cast %107 : vector<4x256xf32> to vector<1x4x256xf32>
    tpu.vector_store %arg6[%c0_98, %c0_99, %c0_100], %110 {strides = array<i32>} : memref<1x4x256xf32, #tpu.memory_space<vmem>>, vector<1x4x256xf32>,
    return
  }
  func.func @transform_0(%arg0: i32) -> (i32, i32, i32) {
    %c0_i32 = arith.constant 0 : i32
    %c0_i32_0 = arith.constant 0 : i32
    %c0_i32_1 = arith.constant 0 : i32
    return %arg0, %c0_i32, %c0_i32_0 : i32, i32, i32
  }
  func.func @transform_1(%arg0: i32) -> (i32, i32) {
    %c0_i32 = arith.constant 0 : i32
    %c0_i32_0 = arith.constant 0 : i32
    %c0_i32_1 = arith.constant 0 : i32
    return %c0_i32, %c0_i32_0 : i32, i32
  }
  func.func @transform_2(%arg0: i32) -> (i32, i32) {
    %c0_i32 = arith.constant 0 : i32
    %c0_i32_0 = arith.constant 0 : i32
    %c0_i32_1 = arith.constant 0 : i32
    return %c0_i32, %c0_i32_0 : i32, i32
  }
  func.func @transform_3(%arg0: i32) -> (i32, i32) {
    %c0_i32 = arith.constant 0 : i32
    %c0_i32_0 = arith.constant 0 : i32
    %c0_i32_1 = arith.constant 0 : i32
    return %c0_i32, %c0_i32_0 : i32, i32
  }
  func.func @transform_4(%arg0: i32) -> (i32, i32) {
    %c0_i32 = arith.constant 0 : i32
    %c0_i32_0 = arith.constant 0 : i32
    %c0_i32_1 = arith.constant 0 : i32
    return %c0_i32, %c0_i32_0 : i32, i32
  }
  func.func @transform_5(%arg0: i32) -> (i32, i32, i32) {
    %c0_i32 = arith.constant 0 : i32
    %c0_i32_0 = arith.constant 0 : i32
    %c0_i32_1 = arith.constant 0 : i32
    return %arg0, %c0_i32, %c0_i32_0 : i32, i32, i32
  }
}

</mosaic_0001>

<llo_original>
// kernel: film_basic_block_forward.1
$region0: #{film_basic_block_forward.1}
  #allocation0 [shape = 'u32[]', space=smem, size = 0x4, offset = 0x4, fixed_abs, tag = 'smem constant byte address 0x4 - core index']
  #allocation1 [shape = 'u32[144,128]{1,0:T(1,128)}', space=vmem, size = 0x12000, scoped, tag = 'internal scratch']
  #allocation2 [shape = 'f32[4,290]{1,0:T(4,128)}', space=vmem, size = 0x1800, scoped, tag = 'scratch operand']
  #allocation3 [shape = 'f32[36,256]{1,0:T(8,128)}', space=vmem, size = 0xa000, scoped, tag = 'scratch operand']
  %s0 = inlined_call_operand.vmem [shape: f32[2,4,256], index: 0, kind: input, shape index: {}]
  %s1 = inlined_call_operand.vmem [shape: f32[4,36], index: 1, kind: input, shape index: {}]
  %s2 = inlined_call_operand.vmem [shape: f32[4,1], index: 2, kind: input, shape index: {}]
  %s3 = inlined_call_operand.vmem [shape: f32[4,36], index: 3, kind: input, shape index: {}]
  %s4 = inlined_call_operand.vmem [shape: f32[4,1], index: 4, kind: input, shape index: {}]
  %s5 = inlined_call_operand.vmem [shape: f32[2,4,256], index: 5, kind: output, shape index: {}]
  %s6 = sld [smem:[#allocation0]]
  $region53: #{film_basic_block_forward.1} parent=0
    _
  %s8 = ssub.s32 1, %s6
  %s9 = scalar_select 0, %s8, %s6
  loop: start=0, step=1, limit=4
  $region2: #{film_basic_block_forward.1} parent=0 // loop_pre_header
    _
  $region3: #{film_basic_block_forward.1} parent=0 // loop_header
    %s11 = sphi 0, %s15
    %p12 = scmp.ge.s32.totalorder %s11, 4
    %s21 = sphi 0, %s23
    %s24 = sphi 0, %s21
    %s25 = sphi 0, %s24
    %s41 = sphi 0, %s25
    %s45 = sphi 0, %s45
    %s47 = sphi 0, %s45
    %s48 = sphi 0, %s47
    %s62 = sphi 0, %s48
    %s66 = sphi 0, %s66
    %s68 = sphi 0, %s66
    %s69 = sphi 0, %s68
    %s83 = sphi 0, %s69
    %s87 = sphi 0, %s87
    %s89 = sphi 0, %s87
    %s90 = sphi 0, %s89
    %s104 = sphi 0, %s90
    %s108 = sphi 0, %s108
    %s110 = sphi 0, %s108
    %s111 = sphi 0, %s110
    %s125 = sphi 0, %s111
    %s131 = sphi 0, %s133
    %s134 = sphi 0, %s131
    %s135 = sphi 0, %s134
    %s151 = sphi 0, %s135
  $region4: #{film_basic_block_forward.1} parent=0 // loop_header_branch
    %14 = sbr.rel (%p12) target = $region8
  $region5: #{film_basic_block_forward.1} parent=0 // loop_body
    %s16 = ssub.s32 %s11, 1
    %s17 = ssub.s32 %s11, 2
    %s18 = sadd.s32 %s11, 1
    %s19 = ssub.s32 %s11, %s18
    %p20 = scmp.eq.s32.totalorder %s19, 0
    %s22 = sadd.s32 %s21, 1
    %s23 = scalar_select %p20, %s21, %s22
    %p26 = pneg %p20
    %p27 = scmp.eq.s32.totalorder %s11, 1
    %p28 = por %p26, %p27
    %p29 = scmp.ne.s32.totalorder %s21, %s24
    %p30 = scmp.eq.s32.totalorder %s11, 0
    %p31 = por %p29, %p30
    %p32 = scmp.ne.s32.totalorder %s21, %s24
    %p33 = scmp.eq.s32.totalorder %s16, 1
    %p34 = por %p32, %p33
    %p35 = scmp.ne.s32.totalorder %s24, %s25
    %p36 = scmp.eq.s32.totalorder %s16, 0
    %p37 = por %p35, %p36
    %p38 = scmp.ne.s32.totalorder %s24, %s25
    %p39 = scmp.eq.s32.totalorder %s17, 1
    %p40 = por %p38, %p39
    %p42 = scmp.ne.s32.totalorder %s25, %s41
    %p43 = scmp.eq.s32.totalorder %s17, 0
    %p44 = por %p42, %p43
    %s46 = sadd.s32 %s45, 1
    %p49 = scmp.eq.s32.totalorder %s11, 1
    %p50 = scmp.ne.s32.totalorder %s45, %s47
    %p51 = scmp.eq.s32.totalorder %s11, 0
    %p52 = por %p50, %p51
    %p53 = scmp.ne.s32.totalorder %s45, %s47
    %p54 = scmp.eq.s32.totalorder %s16, 1
    %p55 = por %p53, %p54
    %p56 = scmp.ne.s32.totalorder %s47, %s48
    %p57 = scmp.eq.s32.totalorder %s16, 0
    %p58 = por %p56, %p57
    %p59 = scmp.ne.s32.totalorder %s47, %s48
    %p60 = scmp.eq.s32.totalorder %s17, 1
    %p61 = por %p59, %p60
    %p63 = scmp.ne.s32.totalorder %s48, %s62
    %p64 = scmp.eq.s32.totalorder %s17, 0
    %p65 = por %p63, %p64
    %s67 = sadd.s32 %s66, 1
    %p70 = scmp.eq.s32.totalorder %s11, 1
    %p71 = scmp.ne.s32.totalorder %s66, %s68
    %p72 = scmp.eq.s32.totalorder %s11, 0
    %p73 = por %p71, %p72
    %p74 = scmp.ne.s32.totalorder %s66, %s68
    %p75 = scmp.eq.s32.totalorder %s16, 1
    %p76 = por %p74, %p75
    %p77 = scmp.ne.s32.totalorder %s68, %s69
    %p78 = scmp.eq.s32.totalorder %s16, 0
    %p79 = por %p77, %p78
    %p80 = scmp.ne.s32.totalorder %s68, %s69
    %p81 = scmp.eq.s32.totalorder %s17, 1
    %p82 = por %p80, %p81
    %p84 = scmp.ne.s32.totalorder %s69, %s83
    %p85 = scmp.eq.s32.totalorder %s17, 0
    %p86 = por %p84, %p85
    %s88 = sadd.s32 %s87, 1
    %p91 = scmp.eq.s32.totalorder %s11, 1
    %p92 = scmp.ne.s32.totalorder %s87, %s89
    %p93 = scmp.eq.s32.totalorder %s11, 0
    %p94 = por %p92, %p93
    %p95 = scmp.ne.s32.totalorder %s87, %s89
    %p96 = scmp.eq.s32.totalorder %s16, 1
    %p97 = por %p95, %p96
    %p98 = scmp.ne.s32.totalorder %s89, %s90
    %p99 = scmp.eq.s32.totalorder %s16, 0
    %p100 = por %p98, %p99
    %p101 = scmp.ne.s32.totalorder %s89, %s90
    %p102 = scmp.eq.s32.totalorder %s17, 1
    %p103 = por %p101, %p102
    %p105 = scmp.ne.s32.totalorder %s90, %s104
    %p106 = scmp.eq.s32.totalorder %s17, 0
    %p107 = por %p105, %p106
    %s109 = sadd.s32 %s108, 1
    %p112 = scmp.eq.s32.totalorder %s11, 1
    %p113 = scmp.ne.s32.totalorder %s108, %s110
    %p114 = scmp.eq.s32.totalorder %s11, 0
    %p115 = por %p113, %p114
    %p116 = scmp.ne.s32.totalorder %s108, %s110
    %p117 = scmp.eq.s32.totalorder %s16, 1
    %p118 = por %p116, %p117
    %p119 = scmp.ne.s32.totalorder %s110, %s111
    %p120 = scmp.eq.s32.totalorder %s16, 0
    %p121 = por %p119, %p120
    %p122 = scmp.ne.s32.totalorder %s110, %s111
    %p123 = scmp.eq.s32.totalorder %s17, 1
    %p124 = por %p122, %p123
    %p126 = scmp.ne.s32.totalorder %s111, %s125
    %p127 = scmp.eq.s32.totalorder %s17, 0
    %p128 = por %p126, %p127
    %s129 = ssub.s32 %s11, %s18
    %p130 = scmp.eq.s32.totalorder %s129, 0
    %s132 = sadd.s32 %s131, 1
    %s133 = scalar_select %p130, %s131, %s132
    %p136 = pneg %p130
    %p137 = scmp.eq.s32.totalorder %s11, 1
    %p138 = por %p136, %p137
    %p139 = scmp.ne.s32.totalorder %s131, %s134
    %p140 = scmp.eq.s32.totalorder %s11, 0
    %p141 = por %p139, %p140
    %p142 = scmp.ne.s32.totalorder %s131, %s134
    %p143 = scmp.eq.s32.totalorder %s16, 1
    %p144 = por %p142, %p143
    %p145 = scmp.ne.s32.totalorder %s134, %s135
    %p146 = scmp.eq.s32.totalorder %s16, 0
    %p147 = por %p145, %p146
    %p148 = scmp.ne.s32.totalorder %s134, %s135
    %p149 = scmp.eq.s32.totalorder %s17, 1
    %p150 = por %p148, %p149
    %p152 = scmp.ne.s32.totalorder %s135, %s151
    %p153 = scmp.eq.s32.totalorder %s17, 0
    %p154 = por %p152, %p153
    %p155 = scmp.le.s32.totalorder 1, %s11
    %p156 = scmp.lt.s32.totalorder %s11, 3
    %p157 = pnand %p155, %p156
    %p158 = pneg %p157
    // Predicated region
    $region9: #{film_basic_block_forward.1} parent=5 // pred_check
      _
    $region10: #{film_basic_block_forward.1} parent=5 // pred_check_branch
      %160 = sbr.rel (%p157) target = $region12
    $region11: #{film_basic_block_forward.1} parent=5 // pred_region
      %s161 = ssub.s32 %s11, 1
      // Predicated region
      $region13: #{film_basic_block_forward.1} parent=11 // pred_check
        %p162 = pneg %p58
      $region14: #{film_basic_block_forward.1} parent=11 // pred_check_branch
        %164 = sbr.rel (%p162) target = $region16
      $region15: #{film_basic_block_forward.1} parent=11 // pred_region
        _
      $region16: #{film_basic_block_forward.1} parent=11 // pred_fallthru
        _
      // Predicated region
      $region17: #{film_basic_block_forward.1} parent=11 // pred_check
        %p165 = pneg %p79
      $region18: #{film_basic_block_forward.1} parent=11 // pred_check_branch
        %167 = sbr.rel (%p165) target = $region20
      $region19: #{film_basic_block_forward.1} parent=11 // pred_region
        _
      $region20: #{film_basic_block_forward.1} parent=11 // pred_fallthru
        _
      // Predicated region
      $region21: #{film_basic_block_forward.1} parent=11 // pred_check
        %p168 = pneg %p100
      $region22: #{film_basic_block_forward.1} parent=11 // pred_check_branch
        %170 = sbr.rel (%p168) target = $region24
      $region23: #{film_basic_block_forward.1} parent=11 // pred_region
        _
      $region24: #{film_basic_block_forward.1} parent=11 // pred_fallthru
        _
      // Predicated region
      $region25: #{film_basic_block_forward.1} parent=11 // pred_check
        %p171 = pneg %p121
      $region26: #{film_basic_block_forward.1} parent=11 // pred_check_branch
        %173 = sbr.rel (%p171) target = $region28
      $region27: #{film_basic_block_forward.1} parent=11 // pred_region
        _
      $region28: #{film_basic_block_forward.1} parent=11 // pred_fallthru
        _
    $region12: #{film_basic_block_forward.1} parent=5 // pred_fallthru
      _
    %p174 = scmp.lt.s32.totalorder %s11, 2
    // Predicated region
    $region29: #{film_basic_block_forward.1} parent=5 // pred_check
      %p175 = pneg %p174
    $region30: #{film_basic_block_forward.1} parent=5 // pred_check_branch
      %177 = sbr.rel (%p175) target = $region32
    $region31: #{film_basic_block_forward.1} parent=5 // pred_region
      // Predicated region
      $region33: #{film_basic_block_forward.1} parent=31 // pred_check
        %p178 = pneg %p31
      $region34: #{film_basic_block_forward.1} parent=31 // pred_check_branch
        %180 = sbr.rel (%p178) target = $region36
      $region35: #{film_basic_block_forward.1} parent=31 // pred_region
        %p181 = scmp.lt.s32.totalorder %s11, 1
        %s182 = scalar_select %p181, %s11, 1
        %s183 = smul.addr %s182, 2
        %s184 = smul.addr %s183, 4
        %s185 = scalar_lea.vmem %s0, %s184
      $region36: #{film_basic_block_forward.1} parent=31 // pred_fallthru
        _
    $region32: #{film_basic_block_forward.1} parent=5 // pred_fallthru
      _
    %p186 = scmp.le.s32.totalorder 1, %s11
    %p187 = scmp.lt.s32.totalorder %s11, 3
    %p188 = pnand %p186, %p187
    %p189 = pneg %p188
    // Predicated region
    $region37: #{film_basic_block_forward.1} parent=5 // pred_check
      _
    $region38: #{film_basic_block_forward.1} parent=5 // pred_check_branch
      %191 = sbr.rel (%p188) target = $region40
    $region39: #{film_basic_block_forward.1} parent=5 // pred_region
      %s192 = ssub.s32 %s11, 1
      %p193 = scmp.lt.s32.totalorder %s16, 1
      %s194 = scalar_select %p193, %s16, 1
      %s195 = smul.addr %s194, 2
      %s196 = smul.addr %s195, 4
      %s197 = scalar_lea.vmem %s0, %s196
      %p198 = pneg %p37
      %p199 = pneg %p34
      %p200 = pneg %p58
      %p201 = pneg %p55
      %p202 = pneg %p79
      %p203 = pneg %p76
      %p204 = pneg %p100
      %p205 = pneg %p97
      %p206 = pneg %p121
      %p207 = pneg %p118
      %p208 = pneg %p147
      %p209 = pneg %p144
      %p210 = scmp.lt.s32.totalorder %s16, 1
      %s211 = scalar_select %p210, %s16, 1
      %s212 = smul.addr %s211, 2
      %s213 = smul.addr %s212, 4
      %s214 = scalar_lea.vmem %s5, %s213
      %p215 = scmp.lt.s32.totalorder %s16, 1
      %s216 = scalar_select %p215, %s16, 1
      %s217 = smul.addr %s216, 2
      %s218 = smul.addr %s217, 4
      %s219 = scalar_lea.vmem %s0, %s218
      %p220 = scmp.lt.s32.totalorder %s16, 1
      %s221 = scalar_select %p220, %s16, 1
      %s222 = smul.addr %s221, 2
      %s223 = smul.addr %s222, 4
      %s224 = scalar_lea.vmem %s5, %s223
      %v225 = vlaneseq
      %v226 = vand.u32 %v225, 127
      %v227 = vadd.s32 %v226, 128
      %vm228 = vcmp.lt.s32.totalorder %v226, 0
      %v229 = vsub.s32 0, %v226
      %v230 = vsel %vm228, %v229, %v226
      %v231 = vshrl.u32 %v230, 4
      %v232 = vand.u32 %v230, 15
      %v233 = vsub.s32 0, %v232
      %v234 = vsel %vm228, %v233, %v232
      %vm235 = vcmp.lt.s32.totalorder %v227, 0
      %v236 = vsub.s32 0, %v227
      %v237 = vsel %vm235, %v236, %v227
      %v238 = vshrl.u32 %v237, 4
      %v239 = vand.u32 %v237, 15
      %v240 = vsub.s32 0, %v239
      %v241 = vsel %vm235, %v240, %v239
      %vm242 = vcmp.ne.s32.totalorder %v234, 0
      %vm243 = vcmp.ne.s32.totalorder %v241, 0
      %vm244 = vcmp.lt.s32.totalorder %v234, 0
      %vm245 = vcmp.lt.s32.totalorder %v241, 0
      %vm246 = vmand %vm244, %vm242
      %vm247 = vmand %vm245, %vm243
      %v248 = vadd.s32 %v234, 16
      %v249 = vadd.s32 %v241, 16
      %v250 = vsel %vm246, %v248, %v234
      %v251 = vsel %vm247, %v249, %v241
      %vm252 = vcmp.ne.s32.totalorder %v250, 0
      %vm253 = vcmp.ne.s32.totalorder %v251, 0
      %v254 = vsel %vm252, 1, 0
      %v255 = vsel %vm253, 1, 0
      %vm256 = vcmp.eq.s32.totalorder %v254, 1
      %vm257 = vcmp.eq.s32.totalorder %v255, 1
      %vm258 = vcmp.ne.s32.totalorder %v250, 15
      %vm259 = vcmp.ne.s32.totalorder %v251, 15
      %v260 = vsel %vm258, 1, 0
      %v261 = vsel %vm259, 1, 0
      %vm262 = vcmp.eq.s32.totalorder %v260, 1
      %vm263 = vcmp.eq.s32.totalorder %v261, 1
      %264 = vst [vmem:[#allocation2] sm:$0xff] 0.0
      %vm265 = vcmask 273408
      %266 = vst.msk [vmem:[#allocation2 + $0x8] sm:$0xf] %vm265, 0.0
      %v267 = vld [vmem:[%s219] sm:$0xff]
      %269 = vrot.lane.b32.xlu0 %v267, 17
      %v270 = vpop.permute.xlu0 %269
      %v271 = vrot.slane %v270, 4
      %vm272 = vcmask 138240
      %v273 = vsel %vm272, %v271, %v270
      %vm276 = vcmask 1043592
      %vm277 = vcmask 1047556
      %vm278 = vmor %vm277, %vm276
      %279 = vst.msk [vmem:[#allocation2] sm:$0xff] %vm278, %v273
      %vm280 = vcmask 134144
      %281 = vst.msk [vmem:[#allocation2 + $0x8] sm:$0xf] %vm280, %v271
      %v282 = vld [vmem:[%s1] sm:$0xf]
      %v283 = vld [vmem:[%s2] sm:$0xf]
      %v284 = vld [vmem:[#allocation2] sm:$0xff]
      %v286 = vcombine.high %v284, %v284
      %v288 = vsel %vm256, %v284, 0.0
      %v289 = vsel %vm257, %v286, 0.0
      %290 = vst [vmem:[#allocation3] sm:$0xf] %v288
      %291 = vst [vmem:[#allocation3 + $0x8] sm:$0xf] %v289
      %v292 = vld [vmem:[#allocation2] sm:$0xff]
      %v293 = vld [vmem:[#allocation2 + $0x8] sm:$0xf]
      %v296 = vcombine.low %v292, %v292
      %v297 = vcombine.low %v293, %v293
      %298 = vrot.lane.b32.xlu0 %v296, 127
      %v299 = vpop.permute.xlu0 %298
      %300 = vrot.lane.b32.xlu0 %v292, 127
      %v301 = vpop.permute.xlu0 %300
      %302 = vrot.lane.b32.xlu0 %v297, 127
      %v303 = vpop.permute.xlu0 %302
      %vm304 = vcmask 1039360
      %v305 = vsel %vm304, %v299, %v301
      %v306 = vsel %vm304, %v301, %v303
      %309 = vst [vmem:[#allocation3] sm:$0xf0] %v305
      %310 = vst [vmem:[#allocation3 + $0x8] sm:$0xf0] %v306
      %v311 = vld [vmem:[#allocation2] sm:$0xff]
      %v312 = vld [vmem:[#allocation2 + $0x8] sm:$0xf]
      %v315 = vcombine.high %v311, %v311
      %316 = vrot.lane.b32.xlu0 %v311, 126
      %v317 = vpop.permute.xlu0 %316
      %318 = vrot.lane.b32.xlu0 %v315, 126
      %v319 = vpop.permute.xlu0 %318
      %320 = vrot.lane.b32.xlu0 %v312, 126
      %v321 = vpop.permute.xlu0 %320
      %vm322 = vcmask 1031168
      %v323 = vsel %vm322, %v317, %v319
      %v324 = vsel %vm322, %v319, %v321
      %v327 = vsel %vm262, %v323, 0.0
      %v328 = vsel %vm263, %v324, 0.0
      %329 = vst [vmem:[#allocation3 + $0x10] sm:$0xf] %v327
      %330 = vst [vmem:[#allocation3 + $0x18] sm:$0xf] %v328
      %v331 = vld [vmem:[#allocation2] sm:$0xff]
      %v332 = vld [vmem:[#allocation2 + $0x8] sm:$0xf]
      %v335 = vcombine.high %v331, %v331
      %336 = vrot.lane.b32.xlu0 %v331, 112
      %v337 = vpop.permute.xlu0 %336
      %338 = vrot.lane.b32.xlu0 %v335, 112
      %v339 = vpop.permute.xlu0 %338
      %340 = vrot.lane.b32.xlu0 %v332, 112
      %v341 = vpop.permute.xlu0 %340
      %vm342 = vcmask 916480
      %v343 = vsel %vm342, %v337, %v339
      %v344 = vsel %vm342, %v339, %v341
      %v347 = vsel %vm256, %v343, 0.0
      %v348 = vsel %vm257, %v344, 0.0
      %v351 = vrot.slane %v347, 4
      %v352 = vrot.slane %v348, 4
      %355 = vst [vmem:[#allocation3 + $0x10] sm:$0xf0] %v351
      %356 = vst [vmem:[#allocation3 + $0x18] sm:$0xf0] %v352
      %v357 = vld [vmem:[#allocation2] sm:$0xff]
      %v358 = vld [vmem:[#allocation2 + $0x8] sm:$0xf]
      %v361 = vcombine.high %v357, %v357
      %362 = vrot.lane.b32.xlu0 %v357, 111
      %v363 = vpop.permute.xlu0 %362
      %364 = vrot.lane.b32.xlu0 %v361, 111
      %v365 = vpop.permute.xlu0 %364
      %366 = vrot.lane.b32.xlu0 %v358, 111
      %v367 = vpop.permute.xlu0 %366
      %vm368 = vcmask 908288
      %v369 = vsel %vm368, %v363, %v365
      %v370 = vsel %vm368, %v365, %v367
      %373 = vst [vmem:[#allocation3 + $0x20] sm:$0xf] %v369
      %374 = vst [vmem:[#allocation3 + $0x28] sm:$0xf] %v370
      %v375 = vld [vmem:[#allocation2] sm:$0xff]
      %v376 = vld [vmem:[#allocation2 + $0x8] sm:$0xf]
      %v379 = vcombine.high %v375, %v375
      %380 = vrot.lane.b32.xlu0 %v375, 110
      %v381 = vpop.permute.xlu0 %380
      %382 = vrot.lane.b32.xlu0 %v379, 110
      %v383 = vpop.permute.xlu0 %382
      %384 = vrot.lane.b32.xlu0 %v376, 110
      %v385 = vpop.permute.xlu0 %384
      %vm386 = vcmask 900096
      %v387 = vsel %vm386, %v381, %v383
      %v388 = vsel %vm386, %v383, %v385
      %v391 = vsel %vm262, %v387, 0.0
      %v392 = vsel %vm263, %v388, 0.0
      %v395 = vrot.slane %v391, 4
      %v396 = vrot.slane %v392, 4
      %399 = vst [vmem:[#allocation3 + $0x20] sm:$0xf0] %v395
      %400 = vst [vmem:[#allocation3 + $0x28] sm:$0xf0] %v396
      %v401 = vld [vmem:[#allocation2] sm:$0xff]
      %v402 = vld [vmem:[#allocation2 + $0x8] sm:$0xf]
      %v405 = vcombine.high %v401, %v401
      %406 = vrot.lane.b32.xlu0 %v401, 96
      %v407 = vpop.permute.xlu0 %406
      %408 = vrot.lane.b32.xlu0 %v405, 96
      %v409 = vpop.permute.xlu0 %408
      %410 = vrot.lane.b32.xlu0 %v402, 96
      %v411 = vpop.permute.xlu0 %410
      %vm412 = vcmask 785408
      %v413 = vsel %vm412, %v407, %v409
      %v414 = vsel %vm412, %v409, %v411
      %v417 = vsel %vm256, %v413, 0.0
      %v418 = vsel %vm257, %v414, 0.0
      %419 = vst [vmem:[#allocation3 + $0x30] sm:$0xf] %v417
      %420 = vst [vmem:[#allocation3 + $0x38] sm:$0xf] %v418
      %v421 = vld [vmem:[#allocation2] sm:$0xff]
      %v422 = vld [vmem:[#allocation2 + $0x8] sm:$0xf]
      %v425 = vcombine.low %v421, %v421
      %v426 = vcombine.low %v422, %v422
      %427 = vrot.lane.b32.xlu0 %v425, 95
      %v428 = vpop.permute.xlu0 %427
      %429 = vrot.lane.b32.xlu0 %v421, 95
      %v430 = vpop.permute.xlu0 %429
      %431 = vrot.lane.b32.xlu0 %v426, 95
      %v432 = vpop.permute.xlu0 %431
      %vm433 = vcmask 777216
      %v434 = vsel %vm433, %v428, %v430
      %v435 = vsel %vm433, %v430, %v432
      %438 = vst [vmem:[#allocation3 + $0x30] sm:$0xf0] %v434
      %439 = vst [vmem:[#allocation3 + $0x38] sm:$0xf0] %v435
      %v440 = vld [vmem:[#allocation2] sm:$0xff]
      %v441 = vld [vmem:[#allocation2 + $0x8] sm:$0xf]
      %v444 = vcombine.high %v440, %v440
      %445 = vrot.lane.b32.xlu0 %v440, 94
      %v446 = vpop.permute.xlu0 %445
      %447 = vrot.lane.b32.xlu0 %v444, 94
      %v448 = vpop.permute.xlu0 %447
      %449 = vrot.lane.b32.xlu0 %v441, 94
      %v450 = vpop.permute.xlu0 %449
      %vm451 = vcmask 769024
      %v452 = vsel %vm451, %v446, %v448
      %v453 = vsel %vm451, %v448, %v450
      %v456 = vsel %vm262, %v452, 0.0
      %v457 = vsel %vm263, %v453, 0.0
      %458 = vst [vmem:[#allocation3 + $0x40] sm:$0xf] %v456
      %459 = vst [vmem:[#allocation3 + $0x48] sm:$0xf] %v457
      %v460 = vld [vmem:[#allocation3] sm:$0xff]
      %v461 = vld [vmem:[#allocation3 + $0x8] sm:$0xff]
      %v462 = vld [vmem:[#allocation3 + $0x10] sm:$0xff]
      %v463 = vld [vmem:[#allocation3 + $0x18] sm:$0xff]
      %v464 = vld [vmem:[#allocation3 + $0x20] sm:$0xff]
      %v465 = vld [vmem:[#allocation3 + $0x28] sm:$0xff]
      %v466 = vld [vmem:[#allocation3 + $0x30] sm:$0xff]
      %v467 = vld [vmem:[#allocation3 + $0x38] sm:$0xff]
      %v468 = vld [vmem:[#allocation3 + $0x40] sm:$0xf]
      %v469 = vld [vmem:[#allocation3 + $0x48] sm:$0xf]
      %471 = vset.pattern.permute.xlu0 0
      %472 = vperm.xlu0 %471, %v283
      %v473 = vpop.permute.xlu0 %472
      %vm475 = vcmask 293888
      %v477 = vsel %vm475, %v282, 0
      %vm479 = vcmask 1043456
      %v481 = vsel %vm479, %v468, 0
      %v484 = vsel %vm479, %v469, 0
      %486 = vmatprep.subr.mxu0 0.0
      %487 = vmatpush1.msra.mxu0 0.0
      %488 = vmatprep.subr.mxu0 0.0
      %489 = vmatpush1.msra.mxu0 0.0
      %490 = vmatprep.subr.mxu0 0.0
      %491 = vmatpush1.msra.mxu0 0.0
      %492 = vmatprep.subr.mxu0 0.0
      %493 = vmatpush1.msra.mxu0 0.0
      %494 = vmatprep.subr.mxu0 0.0
      %495 = vmatpush1.msra.mxu0 0.0
      %496 = vmatprep.subr.mxu0 0.0
      %497 = vmatpush1.msra.mxu0 0.0
      %498 = vmatprep.subr.mxu0 0.0
      %499 = vmatpush1.msra.mxu0 0.0
      %500 = vmatprep.subr.mxu0 0.0
      %501 = vmatpush1.msra.mxu0 0.0
      %502 = vmatprep.subr.mxu0 0.0
      %503 = vmatpush1.msra.mxu0 0.0
      %504 = vmatprep.subr.mxu0 0.0
      %505 = vmatpush1.msra.mxu0 0.0
      %506 = vmatprep.subr.mxu0 0.0
      %507 = vmatpush1.msra.mxu0 0.0
      %508 = vmatprep.subr.mxu0 %v484
      %509 = vmatpush1.msra.mxu0 %v481
      %510 = vmatprep.subr.mxu0 %v467
      %511 = vmatpush1.msra.mxu0 %v466
      %512 = vmatprep.subr.mxu0 %v465
      %513 = vmatpush1.msra.mxu0 %v464
      %514 = vmatprep.subr.mxu0 %v463
      %515 = vmatpush1.msra.mxu0 %v462
      %516 = vmatprep.subr.mxu0 %v461
      %517 = vmatpush1.msra.mxu0 %v460
      %518 = vmatprep.subr.mxu0 0.0
      %519 = vmatpush2.msra.mxu0 0.0
      %520 = vmatprep.subr.mxu0 0.0
      %521 = vmatpush2.msra.mxu0 0.0
      %522 = vmatprep.subr.mxu0 0.0
      %523 = vmatpush2.msra.mxu0 0.0
      %524 = vmatprep.subr.mxu0 0.0
      %525 = vmatpush2.msra.mxu0 0.0
      %526 = vmatprep.subr.mxu0 0.0
      %527 = vmatpush2.msra.mxu0 0.0
      %528 = vmatprep.subr.mxu0 0.0
      %529 = vmatpush2.msra.mxu0 0.0
      %530 = vmatprep.subr.mxu0 0.0
      %531 = vmatpush2.msra.mxu0 0.0
      %532 = vmatprep.subr.mxu0 0.0
      %533 = vmatpush2.msra.mxu0 0.0
      %534 = vmatprep.subr.mxu0 0.0
      %535 = vmatpush2.msra.mxu0 0.0
      %536 = vmatprep.subr.mxu0 0.0
      %537 = vmatpush2.msra.mxu0 0.0
      %538 = vmatprep.subr.mxu0 0.0
      %539 = vmatpush2.msra.mxu0 0.0
      %540 = vmatprep.subr.mxu0 0.0
      %541 = vmatpush2.msra.mxu0 0.0
      %542 = vmatprep.subr.mxu0 0.0
      %543 = vmatpush2.msra.mxu0 0.0
      %544 = vmatprep.subr.mxu0 0.0
      %545 = vmatpush2.msra.mxu0 0.0
      %546 = vmatprep.subr.mxu0 0.0
      %547 = vmatpush2.msra.mxu0 0.0
      %548 = vmatprep.subr.mxu0 0.0
      %549 = vmatpush2.msra.mxu0 0.0
      %550 = vmatprep.mubr.f32.mxu0 0.0
      %551 = vmatmul.mubr.f32.gmra.mxu0 %v477
      %v552 = vpop.f32.mrf.mxu0
      %v553 = vadd.f32 %v473, %v552
      %v554 = vpop.f32.mrf.mxu0
      %v555 = vadd.f32 %v473, %v554
      %556 = vdwg.mxu0
      %v557 = vmax.f32 %v553, 0.0
      %v558 = vmax.f32 %v555, 0.0
      %v561 = vcombine.low %v557, %v558
      %562 = vrot.lane.b32.xlu0 %v561, 17
      %v563 = vpop.permute.xlu0 %562
      %v564 = vrot.slane %v563, 4
      %v565 = vsel %vm272, %v564, %v563
      %568 = vst.msk [vmem:[#allocation2] sm:$0xff] %vm278, %v565
      %569 = vst.msk [vmem:[#allocation2 + $0x8] sm:$0xf] %vm280, %v564
      %v570 = vld [vmem:[%s3] sm:$0xf]
      %v571 = vld [vmem:[%s4] sm:$0xf]
      %v572 = vld [vmem:[#allocation2] sm:$0xff]
      %v574 = vcombine.high %v572, %v572
      %v576 = vsel %vm256, %v572, 0.0
      %v577 = vsel %vm257, %v574, 0.0
      %578 = vst [vmem:[#allocation3] sm:$0xf] %v576
      %579 = vst [vmem:[#allocation3 + $0x8] sm:$0xf] %v577
      %v580 = vld [vmem:[#allocation2] sm:$0xff]
      %v581 = vld [vmem:[#allocation2 + $0x8] sm:$0xf]
      %v584 = vcombine.low %v580, %v580
      %v585 = vcombine.low %v581, %v581
      %586 = vrot.lane.b32.xlu0 %v584, 127
      %v587 = vpop.permute.xlu0 %586
      %588 = vrot.lane.b32.xlu0 %v580, 127
      %v589 = vpop.permute.xlu0 %588
      %590 = vrot.lane.b32.xlu0 %v585, 127
      %v591 = vpop.permute.xlu0 %590
      %v592 = vsel %vm304, %v587, %v589
      %v593 = vsel %vm304, %v589, %v591
      %596 = vst [vmem:[#allocation3] sm:$0xf0] %v592
      %597 = vst [vmem:[#allocation3 + $0x8] sm:$0xf0] %v593
      %v598 = vld [vmem:[#allocation2] sm:$0xff]
      %v599 = vld [vmem:[#allocation2 + $0x8] sm:$0xf]
      %v602 = vcombine.high %v598, %v598
      %603 = vrot.lane.b32.xlu0 %v598, 126
      %v604 = vpop.permute.xlu0 %603
      %605 = vrot.lane.b32.xlu0 %v602, 126
      %v606 = vpop.permute.xlu0 %605
      %607 = vrot.lane.b32.xlu0 %v599, 126
      %v608 = vpop.permute.xlu0 %607
      %v609 = vsel %vm322, %v604, %v606
      %v610 = vsel %vm322, %v606, %v608
      %v613 = vsel %vm262, %v609, 0.0
      %v614 = vsel %vm263, %v610, 0.0
      %615 = vst [vmem:[#allocation3 + $0x10] sm:$0xf] %v613
      %616 = vst [vmem:[#allocation3 + $0x18] sm:$0xf] %v614
      %v617 = vld [vmem:[#allocation2] sm:$0xff]
      %v618 = vld [vmem:[#allocation2 + $0x8] sm:$0xf]
      %v621 = vcombine.high %v617, %v617
      %622 = vrot.lane.b32.xlu0 %v617, 112
      %v623 = vpop.permute.xlu0 %622
      %624 = vrot.lane.b32.xlu0 %v621, 112
      %v625 = vpop.permute.xlu0 %624
      %626 = vrot.lane.b32.xlu0 %v618, 112
      %v627 = vpop.permute.xlu0 %626
      %v628 = vsel %vm342, %v623, %v625
      %v629 = vsel %vm342, %v625, %v627
      %v632 = vsel %vm256, %v628, 0.0
      %v633 = vsel %vm257, %v629, 0.0
      %v636 = vrot.slane %v632, 4
      %v637 = vrot.slane %v633, 4
      %640 = vst [vmem:[#allocation3 + $0x10] sm:$0xf0] %v636
      %641 = vst [vmem:[#allocation3 + $0x18] sm:$0xf0] %v637
      %v642 = vld [vmem:[#allocation2] sm:$0xff]
      %v643 = vld [vmem:[#allocation2 + $0x8] sm:$0xf]
      %v646 = vcombine.high %v642, %v642
      %647 = vrot.lane.b32.xlu0 %v642, 111
      %v648 = vpop.permute.xlu0 %647
      %649 = vrot.lane.b32.xlu0 %v646, 111
      %v650 = vpop.permute.xlu0 %649
      %651 = vrot.lane.b32.xlu0 %v643, 111
      %v652 = vpop.permute.xlu0 %651
      %v653 = vsel %vm368, %v648, %v650
      %v654 = vsel %vm368, %v650, %v652
      %657 = vst [vmem:[#allocation3 + $0x20] sm:$0xf] %v653
      %658 = vst [vmem:[#allocation3 + $0x28] sm:$0xf] %v654
      %v659 = vld [vmem:[#allocation2] sm:$0xff]
      %v660 = vld [vmem:[#allocation2 + $0x8] sm:$0xf]
      %v663 = vcombine.high %v659, %v659
      %664 = vrot.lane.b32.xlu0 %v659, 110
      %v665 = vpop.permute.xlu0 %664
      %666 = vrot.lane.b32.xlu0 %v663, 110
      %v667 = vpop.permute.xlu0 %666
      %668 = vrot.lane.b32.xlu0 %v660, 110
      %v669 = vpop.permute.xlu0 %668
      %v670 = vsel %vm386, %v665, %v667
      %v671 = vsel %vm386, %v667, %v669
      %v674 = vsel %vm262, %v670, 0.0
      %v675 = vsel %vm263, %v671, 0.0
      %v678 = vrot.slane %v674, 4
      %v679 = vrot.slane %v675, 4
      %682 = vst [vmem:[#allocation3 + $0x20] sm:$0xf0] %v678
      %683 = vst [vmem:[#allocation3 + $0x28] sm:$0xf0] %v679
      %v684 = vld [vmem:[#allocation2] sm:$0xff]
      %v685 = vld [vmem:[#allocation2 + $0x8] sm:$0xf]
      %v688 = vcombine.high %v684, %v684
      %689 = vrot.lane.b32.xlu0 %v684, 96
      %v690 = vpop.permute.xlu0 %689
      %691 = vrot.lane.b32.xlu0 %v688, 96
      %v692 = vpop.permute.xlu0 %691
      %693 = vrot.lane.b32.xlu0 %v685, 96
      %v694 = vpop.permute.xlu0 %693
      %v695 = vsel %vm412, %v690, %v692
      %v696 = vsel %vm412, %v692, %v694
      %v699 = vsel %vm256, %v695, 0.0
      %v700 = vsel %vm257, %v696, 0.0
      %701 = vst [vmem:[#allocation3 + $0x30] sm:$0xf] %v699
      %702 = vst [vmem:[#allocation3 + $0x38] sm:$0xf] %v700
      %v703 = vld [vmem:[#allocation2] sm:$0xff]
      %v704 = vld [vmem:[#allocation2 + $0x8] sm:$0xf]
      %v707 = vcombine.low %v703, %v703
      %v708 = vcombine.low %v704, %v704
      %709 = vrot.lane.b32.xlu0 %v707, 95
      %v710 = vpop.permute.xlu0 %709
      %711 = vrot.lane.b32.xlu0 %v703, 95
      %v712 = vpop.permute.xlu0 %711
      %713 = vrot.lane.b32.xlu0 %v708, 95
      %v714 = vpop.permute.xlu0 %713
      %v715 = vsel %vm433, %v710, %v712
      %v716 = vsel %vm433, %v712, %v714
      %719 = vst [vmem:[#allocation3 + $0x30] sm:$0xf0] %v715
      %720 = vst [vmem:[#allocation3 + $0x38] sm:$0xf0] %v716
      %v721 = vld [vmem:[#allocation2] sm:$0xff]
      %v722 = vld [vmem:[#allocation2 + $0x8] sm:$0xf]
      %v725 = vcombine.high %v721, %v721
      %726 = vrot.lane.b32.xlu0 %v721, 94
      %v727 = vpop.permute.xlu0 %726
      %728 = vrot.lane.b32.xlu0 %v725, 94
      %v729 = vpop.permute.xlu0 %728
      %730 = vrot.lane.b32.xlu0 %v722, 94
      %v731 = vpop.permute.xlu0 %730
      %v732 = vsel %vm451, %v727, %v729
      %v733 = vsel %vm451, %v729, %v731
      %v736 = vsel %vm262, %v732, 0.0
      %v737 = vsel %vm263, %v733, 0.0
      %738 = vst [vmem:[#allocation3 + $0x40] sm:$0xf] %v736
      %739 = vst [vmem:[#allocation3 + $0x48] sm:$0xf] %v737
      %v740 = vld [vmem:[#allocation3] sm:$0xff]
      %v741 = vld [vmem:[#allocation3 + $0x8] sm:$0xff]
      %v742 = vld [vmem:[#allocation3 + $0x10] sm:$0xff]
      %v743 = vld [vmem:[#allocation3 + $0x18] sm:$0xff]
      %v744 = vld [vmem:[#allocation3 + $0x20] sm:$0xff]
      %v745 = vld [vmem:[#allocation3 + $0x28] sm:$0xff]
      %v746 = vld [vmem:[#allocation3 + $0x30] sm:$0xff]
      %v747 = vld [vmem:[#allocation3 + $0x38] sm:$0xff]
      %v748 = vld [vmem:[#allocation3 + $0x40] sm:$0xf]
      %v749 = vld [vmem:[#allocation3 + $0x48] sm:$0xf]
      %751 = vset.pattern.permute.xlu0 0
      %752 = vperm.xlu0 %751, %v571
      %v753 = vpop.permute.xlu0 %752
      %v756 = vsel %vm475, %v570, 0
      %v759 = vsel %vm479, %v748, 0
      %v762 = vsel %vm479, %v749, 0
      %764 = vmatprep.subr.mxu0 0.0
      %765 = vmatpush1.msra.mxu0 0.0
      %766 = vmatprep.subr.mxu0 0.0
      %767 = vmatpush1.msra.mxu0 0.0
      %768 = vmatprep.subr.mxu0 0.0
      %769 = vmatpush1.msra.mxu0 0.0
      %770 = vmatprep.subr.mxu0 0.0
      %771 = vmatpush1.msra.mxu0 0.0
      %772 = vmatprep.subr.mxu0 0.0
      %773 = vmatpush1.msra.mxu0 0.0
      %774 = vmatprep.subr.mxu0 0.0
      %775 = vmatpush1.msra.mxu0 0.0
      %776 = vmatprep.subr.mxu0 0.0
      %777 = vmatpush1.msra.mxu0 0.0
      %778 = vmatprep.subr.mxu0 0.0
      %779 = vmatpush1.msra.mxu0 0.0
      %780 = vmatprep.subr.mxu0 0.0
      %781 = vmatpush1.msra.mxu0 0.0
      %782 = vmatprep.subr.mxu0 0.0
      %783 = vmatpush1.msra.mxu0 0.0
      %784 = vmatprep.subr.mxu0 0.0
      %785 = vmatpush1.msra.mxu0 0.0
      %786 = vmatprep.subr.mxu0 %v762
      %787 = vmatpush1.msra.mxu0 %v759
      %788 = vmatprep.subr.mxu0 %v747
      %789 = vmatpush1.msra.mxu0 %v746
      %790 = vmatprep.subr.mxu0 %v745
      %791 = vmatpush1.msra.mxu0 %v744
      %792 = vmatprep.subr.mxu0 %v743
      %793 = vmatpush1.msra.mxu0 %v742
      %794 = vmatprep.subr.mxu0 %v741
      %795 = vmatpush1.msra.mxu0 %v740
      %796 = vmatprep.subr.mxu0 0.0
      %797 = vmatpush2.msra.mxu0 0.0
      %798 = vmatprep.subr.mxu0 0.0
      %799 = vmatpush2.msra.mxu0 0.0
      %800 = vmatprep.subr.mxu0 0.0
      %801 = vmatpush2.msra.mxu0 0.0
      %802 = vmatprep.subr.mxu0 0.0
      %803 = vmatpush2.msra.mxu0 0.0
      %804 = vmatprep.subr.mxu0 0.0
      %805 = vmatpush2.msra.mxu0 0.0
      %806 = vmatprep.subr.mxu0 0.0
      %807 = vmatpush2.msra.mxu0 0.0
      %808 = vmatprep.subr.mxu0 0.0
      %809 = vmatpush2.msra.mxu0 0.0
      %810 = vmatprep.subr.mxu0 0.0
      %811 = vmatpush2.msra.mxu0 0.0
      %812 = vmatprep.subr.mxu0 0.0
      %813 = vmatpush2.msra.mxu0 0.0
      %814 = vmatprep.subr.mxu0 0.0
      %815 = vmatpush2.msra.mxu0 0.0
      %816 = vmatprep.subr.mxu0 0.0
      %817 = vmatpush2.msra.mxu0 0.0
      %818 = vmatprep.subr.mxu0 0.0
      %819 = vmatpush2.msra.mxu0 0.0
      %820 = vmatprep.subr.mxu0 0.0
      %821 = vmatpush2.msra.mxu0 0.0
      %822 = vmatprep.subr.mxu0 0.0
      %823 = vmatpush2.msra.mxu0 0.0
      %824 = vmatprep.subr.mxu0 0.0
      %825 = vmatpush2.msra.mxu0 0.0
      %826 = vmatprep.subr.mxu0 0.0
      %827 = vmatpush2.msra.mxu0 0.0
      %828 = vmatprep.mubr.f32.mxu0 0.0
      %829 = vmatmul.mubr.f32.gmra.mxu0 %v756
      %v830 = vpop.f32.mrf.mxu0
      %v831 = vadd.f32 %v753, %v830
      %v832 = vpop.f32.mrf.mxu0
      %v833 = vadd.f32 %v753, %v832
      %834 = vdwg.mxu0
      %v835 = vcombine.high %v267, %v267
      %v837 = vadd.f32 %v831, %v267
      %v838 = vadd.f32 %v833, %v835
      %v839 = vmax.f32 %v837, 0.0
      %v840 = vmax.f32 %v838, 0.0
      %v843 = vcombine.low %v839, %v840
      %845 = vst [vmem:[%s224] sm:$0xff] %v843
      %p846 = scmp.lt.s32.totalorder %s16, 1
      %s847 = scalar_select %p846, %s16, 1
      %s848 = smul.addr %s847, 2
      %s849 = smul.addr %s848, 4
      %s850 = scalar_lea.vmem %s5, %s849
      // Predicated region
      $region41: #{film_basic_block_forward.1} parent=39 // pred_check
        %p851 = pneg %p144
      $region42: #{film_basic_block_forward.1} parent=39 // pred_check_branch
        %853 = sbr.rel (%p851) target = $region44
      $region43: #{film_basic_block_forward.1} parent=39 // pred_region
        _
      $region44: #{film_basic_block_forward.1} parent=39 // pred_fallthru
        _
    $region40: #{film_basic_block_forward.1} parent=5 // pred_fallthru
      _
    %p854 = scmp.le.s32.totalorder 2, %s11
    // Predicated region
    $region45: #{film_basic_block_forward.1} parent=5 // pred_check
      %p855 = pneg %p854
    $region46: #{film_basic_block_forward.1} parent=5 // pred_check_branch
      %857 = sbr.rel (%p855) target = $region48
    $region47: #{film_basic_block_forward.1} parent=5 // pred_region
      %s858 = ssub.s32 %s11, 2
      // Predicated region
      $region49: #{film_basic_block_forward.1} parent=47 // pred_check
        %p859 = pneg %p150
      $region50: #{film_basic_block_forward.1} parent=47 // pred_check_branch
        %861 = sbr.rel (%p859) target = $region52
      $region51: #{film_basic_block_forward.1} parent=47 // pred_region
        %p862 = scmp.lt.s32.totalorder %s17, 1
        %s863 = scalar_select %p862, %s17, 1
        %s864 = smul.addr %s863, 2
        %s865 = smul.addr %s864, 4
        %s866 = scalar_lea.vmem %s5, %s865
      $region52: #{film_basic_block_forward.1} parent=47 // pred_fallthru
        _
    $region48: #{film_basic_block_forward.1} parent=5 // pred_fallthru
      _
  $region6: #{film_basic_block_forward.1} parent=0 // loop_footer
    %s15 = sadd.s32 1, %s11
  $region7: #{film_basic_block_forward.1} parent=0 // loop_footer_branch
    %10 = sbr.rel target = $region3
  $region8: #{film_basic_block_forward.1} parent=0 // loop_exit
    _

</llo_original>
